<compile_context>
chip_gen: v7x
topology: tpu7x:2x2x1
jax: 0.10.0
libtpu: 0.0.40
codegen_flags: <defaults>
</compile_context>

<pallas_src>
import jax
import jax.numpy as jnp
from jax import lax
from jax.experimental import pallas as pl
from jax.experimental.pallas import tpu as pltpu


def attention_kernel(p_ref, g_ref, lnorm_ref, conv_ref,
                     attn_ref, attended_ref,
                     m_sc, l_sc, acc_sc):
    # p_ref:        (tl, C)  bf16  rows of emb_label @ feat_w for this L block
    # g_ref:        (C, C)   bf16  feat_w^T @ feat_w (Gram matrix)
    # lnorm_ref:    (tl, 1)  f32   ||emb_label|| rows
    # conv_ref:     (C, tm)  bf16  spatial tile of the flattened conv features
    # attn_ref:     (tl, M)  f32   attention rows (VMEM-resident across M tiles)
    # attended_ref: (tl, C)  f32   attention-pooled features
    # scratch: m_sc / l_sc (tl, 1) running max / sum; acc_sc (tl, C) accumulator
    mi = pl.program_id(1)
    n_m = pl.num_programs(1)
    tm = conv_ref.shape[1]

    @pl.when(mi == 0)
    def _init():
        m_sc[...] = jnp.full_like(m_sc, -jnp.inf)
        l_sc[...] = jnp.zeros_like(l_sc)
        acc_sc[...] = jnp.zeros_like(acc_sc)

    conv = conv_ref[...]                                        # (C, tm) bf16

    # cosine-similarity scores for this spatial tile (bf16 MXU, f32 accumulate)
    scores = jnp.dot(p_ref[...], conv,
                     preferred_element_type=jnp.float32)        # (tl, tm)

    # per-column feature norms via the Gram quadratic form ||W x||^2 = x^T G x
    gconv = jnp.dot(g_ref[...], conv,
                    preferred_element_type=jnp.float32)         # (C, tm)
    feat_norm2 = jnp.sum(conv.astype(jnp.float32) * gconv, axis=0, keepdims=True)
    feat_norm = jnp.sqrt(jnp.maximum(feat_norm2, 0.0))          # (1, tm)

    norm = jnp.maximum(lnorm_ref[...] * feat_norm, 1e-4)        # (tl, tm)
    s = scores / norm                                           # f32 cosine scores

    # stash raw scores into the resident attention output buffer
    col = pl.multiple_of(mi * tm, tm)
    attn_ref[:, pl.ds(col, tm)] = s

    # flash-style online softmax statistics + attended accumulation
    m_prev = m_sc[...]
    m_new = jnp.maximum(m_prev, jnp.max(s, axis=1, keepdims=True))
    alpha = jnp.exp(m_prev - m_new)
    p = jnp.exp(s - m_new)                                      # (tl, tm) f32
    l_sc[...] = alpha * l_sc[...] + jnp.sum(p, axis=1, keepdims=True)
    # attended += p @ conv^T without materializing a transpose (contract dim 1)
    acc_sc[...] = alpha * acc_sc[...] + lax.dot_general(
        p.astype(jnp.bfloat16), conv,
        (((1,), (1,)), ((), ())), preferred_element_type=jnp.float32)
    m_sc[...] = m_new

    @pl.when(mi == n_m - 1)
    def _finalize():
        inv_l = pl.reciprocal(l_sc[...], approx=True)           # (tl, 1)
        attn_ref[...] = jnp.exp(attn_ref[...] - m_sc[...]) * inv_l
        attended_ref[...] = (acc_sc[...] * inv_l).astype(attended_ref.dtype)


def _spatial_tile(M):
    # 128-lane multiples; prefer >= 2 tiles so the online-softmax path is used.
    # For production feature maps sweep 256-1024.
    for cand in (512, 256, 128):
        if M % cand == 0 and M // cand >= 2:
            return cand
    # TODO(synk): pad / mask the remainder when M is not a multiple of 128.
    return M


def attention_layer_forward(conv_feat, pos_cls, label_weights, feat_weights,
                            do_softmax=True):
    """conv_feat: (1, C, H, W); pos_cls: (L,) int32.

    Matches AttentionLayer.forward (sim_metric='cosine', do_softmax=True).
    Returns (attention (L, H, W), attended_feat (L, C)).
    """
    assert do_softmax, "kernel implements the do_softmax=True path"
    _, C, H, W = conv_feat.shape
    M = H * W
    L = int(pos_cls.shape[0])

    # Glue (tiny, weight-only / data-independent of the conv map): label gather
    # and the P / G / label-norm precomputation.  conv is fed to the kernel in
    # bf16 (halves the dominant HBM read at production sizes).
    feat_w = feat_weights.astype(jnp.float32)                          # (D, C)
    emb_label = label_weights[pos_cls].astype(jnp.float32)             # (L, D)
    p_mat = (emb_label @ feat_w).astype(jnp.bfloat16)                  # (L, C)
    g_mat = (feat_w.T @ feat_w).astype(jnp.bfloat16)                   # (C, C)
    label_norm = jnp.sqrt(jnp.sum(emb_label * emb_label, axis=1, keepdims=True))

    conv_2d = conv_feat.reshape(C, M).astype(jnp.bfloat16)             # (C, M)

    tl = 8 if L % 8 == 0 else L
    tm = _spatial_tile(M)
    n_l = L // tl
    n_m = M // tm

    attn, attended = pl.pallas_call(
        attention_kernel,
        out_shape=(
            jax.ShapeDtypeStruct((L, M), jnp.float32),
            jax.ShapeDtypeStruct((L, C), jnp.float32),
        ),
        grid_spec=pltpu.PrefetchScalarGridSpec(
            num_scalar_prefetch=0,
            grid=(n_l, n_m),
            in_specs=[
                pl.BlockSpec((tl, C), lambda l, m: (l, 0)),     # P rows
                pl.BlockSpec((C, C), lambda l, m: (0, 0)),      # Gram matrix
                pl.BlockSpec((tl, 1), lambda l, m: (l, 0)),     # label norms
                pl.BlockSpec((C, tm), lambda l, m: (0, m)),     # conv spatial tile
            ],
            out_specs=(
                pl.BlockSpec((tl, M), lambda l, m: (l, 0)),     # attn rows (resident over m)
                pl.BlockSpec((tl, C), lambda l, m: (l, 0)),     # attended rows
            ),
            scratch_shapes=[
                pltpu.VMEM((tl, 1), jnp.float32),               # running max
                pltpu.VMEM((tl, 1), jnp.float32),               # running sum
                pltpu.VMEM((tl, C), jnp.float32),               # attended accumulator
            ],
        ),
        compiler_params=pltpu.CompilerParams(
            dimension_semantics=("parallel", "arbitrary")),
    )(p_mat, g_mat, label_norm, conv_2d)

    return attn.reshape(L, H, W), attended


def _reference(conv_feat, pos_cls, label_weights, feat_weights):
    # pure-JAX f32 reference matching the PyTorch module
    _, C, H, W = conv_feat.shape
    M = H * W
    conv = conv_feat.reshape(C, M)
    emb_label = label_weights[pos_cls]
    emb_feat = feat_weights @ conv
    attn = emb_label @ emb_feat
    ln = jnp.linalg.norm(emb_label, axis=1, keepdims=True)
    fn = jnp.linalg.norm(emb_feat, axis=0, keepdims=True)
    attn = attn / jnp.maximum(ln * fn, 1e-4)
    attn = jax.nn.softmax(attn, axis=1)
    return attn.reshape(-1, H, W), attn @ conv.T


if __name__ == "__main__":
    key = jax.random.PRNGKey(0)
    k1, k2, k3 = jax.random.split(key, 3)

    # small shapes consistent with the module's forward
    num_class = 10
    input_feat_dim = C = 4
    hidden_feat_dim = D = 32
    H = W = 16
    L = 8

    label_weights = jax.random.normal(k1, (num_class, hidden_feat_dim),
                                      dtype=jnp.float32) * 0.01
    feat_weights = jax.random.normal(k2, (hidden_feat_dim, input_feat_dim),
                                     dtype=jnp.float32) * 0.01
    conv_feat = jax.random.normal(k3, (1, C, H, W), dtype=jnp.float32)
    pos_cls = jnp.array([0, 2, 5, 7, 1, 3, 9, 4], dtype=jnp.int32)

    attn_map, attended_feat = attention_layer_forward(
        conv_feat, pos_cls, label_weights, feat_weights)
    jax.block_until_ready((attn_map, attended_feat))

    ref_attn, ref_attended = _reference(conv_feat, pos_cls, label_weights,
                                        feat_weights)
    assert attn_map.shape == (L, H, W)
    assert attended_feat.shape == (L, C)
    # bf16 MXU operands + approx reciprocal => relaxed tolerances
    assert jnp.allclose(attn_map, ref_attn, atol=2e-3, rtol=3e-2)
    assert jnp.allclose(attended_feat, ref_attended, atol=3e-2, rtol=3e-2)

    print("KERNEL_OK")
</pallas_src>

<mosaic_0001>
module attributes {stable_mosaic.version = 11 : i64} {
  func.func @attention_kernel(%arg0: i32, %arg1: i32, %arg2: memref<8x4xbf16, #tpu.memory_space<vmem>>, %arg3: memref<4x4xbf16, #tpu.memory_space<vmem>>, %arg4: memref<8x1xf32, #tpu.memory_space<vmem>>, %arg5: memref<4x128xbf16, #tpu.memory_space<vmem>>, %arg6: memref<8x256xf32, #tpu.memory_space<vmem>>, %arg7: memref<8x4xf32, #tpu.memory_space<vmem>>, %arg8: memref<8x1xf32, #tpu.memory_space<vmem>>, %arg9: memref<8x1xf32, #tpu.memory_space<vmem>>, %arg10: memref<8x4xf32, #tpu.memory_space<vmem>>) attributes {dimension_semantics = [#tpu.dimension_semantics<parallel>, #tpu.dimension_semantics<arbitrary>], iteration_bounds = array<i64: 1, 2>, scalar_prefetch = 0 : i64, scratch_operands = 3 : i64, tpu.core_type = #tpu.core_type<tc>, window_params = [{transform_indices = @transform_0, window_bounds = array<i64: 8, 4>}, {pipeline_mode = #tpu.pipeline_mode<synchronous>, transform_indices = @transform_1, window_bounds = array<i64: 4, 4>}, {transform_indices = @transform_2, window_bounds = array<i64: 8, 1>}, {transform_indices = @transform_3, window_bounds = array<i64: 4, 128>}, {transform_indices = @transform_4, window_bounds = array<i64: 8, 256>}, {transform_indices = @transform_5, window_bounds = array<i64: 8, 4>}]} {
    %c0_i32 = arith.constant 0 : i32
    %0 = arith.cmpi eq, %arg1, %c0_i32 : i32
    %1 = arith.extui %0 : i1 to i32
    %c0_i32_0 = arith.constant 0 : i32
    %2 = arith.cmpi ne, %1, %c0_i32_0 : i32
    scf.if %2 {
      %cst_29 = arith.constant 0xFF800000 : f32
      %52 = vector.broadcast %cst_29 : f32 to vector<8x1xf32>
      %c0_30 = arith.constant 0 : index
      %c0_31 = arith.constant 0 : index
      %53 = vector.load %arg8[%c0_30, %c0_31] : memref<8x1xf32, #tpu.memory_space<vmem>>, vector<8x1xf32>
      tpu.vector_store %arg8[%c0_30, %c0_31], %52 {strides = array<i32>} : memref<8x1xf32, #tpu.memory_space<vmem>>, vector<8x1xf32>,
      %cst_32 = arith.constant 0.000000e+00 : f32
      %54 = vector.broadcast %cst_32 : f32 to vector<8x1xf32>
      %c0_33 = arith.constant 0 : index
      %c0_34 = arith.constant 0 : index
      %55 = vector.load %arg9[%c0_33, %c0_34] : memref<8x1xf32, #tpu.memory_space<vmem>>, vector<8x1xf32>
      tpu.vector_store %arg9[%c0_33, %c0_34], %54 {strides = array<i32>} : memref<8x1xf32, #tpu.memory_space<vmem>>, vector<8x1xf32>,
      %cst_35 = arith.constant 0.000000e+00 : f32
      %56 = vector.broadcast %cst_35 : f32 to vector<8x4xf32>
      %c0_36 = arith.constant 0 : index
      %c0_37 = arith.constant 0 : index
      %57 = vector.load %arg10[%c0_36, %c0_37] : memref<8x4xf32, #tpu.memory_space<vmem>>, vector<8x4xf32>
      tpu.vector_store %arg10[%c0_36, %c0_37], %56 {strides = array<i32>} : memref<8x4xf32, #tpu.memory_space<vmem>>, vector<8x4xf32>,
    } else {
    }
    %c0 = arith.constant 0 : index
    %c0_1 = arith.constant 0 : index
    %3 = vector.load %arg5[%c0, %c0_1] : memref<4x128xbf16, #tpu.memory_space<vmem>>, vector<4x128xbf16>
    %c0_2 = arith.constant 0 : index
    %c0_3 = arith.constant 0 : index
    %4 = vector.load %arg2[%c0_2, %c0_3] : memref<8x4xbf16, #tpu.memory_space<vmem>>, vector<8x4xbf16>
    %cst = arith.constant dense<0.000000e+00> : vector<8x128xf32>
    %5 = tpu.matmul %4, %3, %cst {dimension_numbers = #tpu.dot_dimension_numbers<[1], [0], [0], [1], [0, 0, 1, 1], [], []>} : vector<8x4xbf16>, vector<4x128xbf16>, vector<8x128xf32> -> vector<8x128xf32>
    %c0_4 = arith.constant 0 : index
    %c0_5 = arith.constant 0 : index
    %6 = vector.load %arg3[%c0_4, %c0_5] : memref<4x4xbf16, #tpu.memory_space<vmem>>, vector<4x4xbf16>
    %cst_6 = arith.constant dense<0.000000e+00> : vector<4x128xf32>
    %7 = tpu.matmul %6, %3, %cst_6 {dimension_numbers = #tpu.dot_dimension_numbers<[1], [0], [0], [1], [0, 0, 1, 1], [], []>} : vector<4x4xbf16>, vector<4x128xbf16>, vector<4x128xf32> -> vector<4x128xf32>
    %8 = arith.extf %3 : vector<4x128xbf16> to vector<4x128xf32>
    %9 = arith.mulf %8, %7 : vector<4x128xf32>
    %cst_7 = arith.constant dense<0.000000e+00> : vector<128xf32>
    %10 = vector.multi_reduction <add>, %9, %cst_7 [0] : vector<4x128xf32> to vector<128xf32>
    %11 = vector.shape_cast %10 : vector<128xf32> to vector<1x128xf32>
    %cst_8 = arith.constant 0.000000e+00 : f32
    %12 = vector.broadcast %cst_8 : f32 to vector<1x128xf32>
    %13 = arith.maximumf %11, %12 : vector<1x128xf32>
    %14 = math.sqrt %13 : vector<1x128xf32>
    %c0_9 = arith.constant 0 : index
    %c0_10 = arith.constant 0 : index
    %15 = vector.load %arg4[%c0_9, %c0_10] : memref<8x1xf32, #tpu.memory_space<vmem>>, vector<8x1xf32>
    %16 = vector.broadcast %15 : vector<8x1xf32> to vector<8x128xf32>
    %17 = vector.broadcast %14 : vector<1x128xf32> to vector<8x128xf32>
    %18 = arith.mulf %16, %17 : vector<8x128xf32>
    %cst_11 = arith.constant 9.99999974E-5 : f32
    %19 = vector.broadcast %cst_11 : f32 to vector<8x128xf32>
    %20 = arith.maximumf %18, %19 : vector<8x128xf32>
    %21 = arith.divf %5, %20 : vector<8x128xf32>
    %c128_i32 = arith.constant 128 : i32
    %22 = arith.muli %arg1, %c128_i32 : i32
    %23 = tpu.assume_multiple %22, 128 : i32
    %c0_12 = arith.constant 0 : index
    %24 = arith.index_cast %23 : i32 to index
    %25 = vector.load %arg6[%c0_12, %24] : memref<8x256xf32, #tpu.memory_space<vmem>>, vector<8x128xf32>
    tpu.vector_store %arg6[%c0_12, %24], %21 {strides = array<i32>} : memref<8x256xf32, #tpu.memory_space<vmem>>, vector<8x128xf32>,
    %c0_13 = arith.constant 0 : index
    %c0_14 = arith.constant 0 : index
    %26 = vector.load %arg8[%c0_13, %c0_14] : memref<8x1xf32, #tpu.memory_space<vmem>>, vector<8x1xf32>
    %cst_15 = arith.constant dense<0xFF800000> : vector<8xf32>
    %27 = vector.multi_reduction <maximumf>, %21, %cst_15 [1] : vector<8x128xf32> to vector<8xf32>
    %28 = vector.shape_cast %27 : vector<8xf32> to vector<8x1xf32>
    %29 = arith.maximumf %26, %28 : vector<8x1xf32>
    %30 = arith.subf %26, %29 : vector<8x1xf32>
    %31 = math.exp %30 : vector<8x1xf32>
    %32 = vector.broadcast %29 : vector<8x1xf32> to vector<8x128xf32>
    %33 = arith.subf %21, %32 : vector<8x128xf32>
    %34 = math.exp %33 : vector<8x128xf32>
    %c0_16 = arith.constant 0 : index
    %c0_17 = arith.constant 0 : index
    %35 = vector.load %arg9[%c0_16, %c0_17] : memref<8x1xf32, #tpu.memory_space<vmem>>, vector<8x1xf32>
    %36 = arith.mulf %31, %35 : vector<8x1xf32>
    %cst_18 = arith.constant dense<0.000000e+00> : vector<8xf32>
    %37 = vector.multi_reduction <add>, %34, %cst_18 [1] : vector<8x128xf32> to vector<8xf32>
    %38 = vector.shape_cast %37 : vector<8xf32> to vector<8x1xf32>
    %39 = arith.addf %36, %38 : vector<8x1xf32>
    %c0_19 = arith.constant 0 : index
    %c0_20 = arith.constant 0 : index
    %40 = vector.load %arg9[%c0_19, %c0_20] : memref<8x1xf32, #tpu.memory_space<vmem>>, vector<8x1xf32>
    tpu.vector_store %arg9[%c0_19, %c0_20], %39 {strides = array<i32>} : memref<8x1xf32, #tpu.memory_space<vmem>>, vector<8x1xf32>,
    %c0_21 = arith.constant 0 : index
    %c0_22 = arith.constant 0 : index
    %41 = vector.load %arg10[%c0_21, %c0_22] : memref<8x4xf32, #tpu.memory_space<vmem>>, vector<8x4xf32>
    %42 = vector.broadcast %31 : vector<8x1xf32> to vector<8x4xf32>
    %43 = arith.mulf %42, %41 : vector<8x4xf32>
    %44 = arith.truncf %34 : vector<8x128xf32> to vector<8x128xbf16>
    %cst_23 = arith.constant dense<0.000000e+00> : vector<8x4xf32>
    %45 = tpu.matmul %44, %3, %cst_23 {dimension_numbers = #tpu.dot_dimension_numbers<[1], [1], [0], [0], [0, 0, 1, 0], [], []>} : vector<8x128xbf16>, vector<4x128xbf16>, vector<8x4xf32> -> vector<8x4xf32>
    %46 = arith.addf %43, %45 : vector<8x4xf32>
    %c0_24 = arith.constant 0 : index
    %c0_25 = arith.constant 0 : index
    %47 = vector.load %arg10[%c0_24, %c0_25] : memref<8x4xf32, #tpu.memory_space<vmem>>, vector<8x4xf32>
    tpu.vector_store %arg10[%c0_24, %c0_25], %46 {strides = array<i32>} : memref<8x4xf32, #tpu.memory_space<vmem>>, vector<8x4xf32>,
    %c0_26 = arith.constant 0 : index
    %c0_27 = arith.constant 0 : index
    %48 = vector.load %arg8[%c0_26, %c0_27] : memref<8x1xf32, #tpu.memory_space<vmem>>, vector<8x1xf32>
    tpu.vector_store %arg8[%c0_26, %c0_27], %29 {strides = array<i32>} : memref<8x1xf32, #tpu.memory_space<vmem>>, vector<8x1xf32>,
    %c1_i32 = arith.constant 1 : i32
    %49 = arith.cmpi eq, %arg1, %c1_i32 : i32
    %50 = arith.extui %49 : i1 to i32
    %c0_i32_28 = arith.constant 0 : i32
    %51 = arith.cmpi ne, %50, %c0_i32_28 : i32
    scf.if %51 {
      %c0_29 = arith.constant 0 : index
      %c0_30 = arith.constant 0 : index
      %52 = vector.load %arg9[%c0_29, %c0_30] : memref<8x1xf32, #tpu.memory_space<vmem>>, vector<8x1xf32>
      %53 = tpu.reciprocal %52 {approx = true} : vector<8x1xf32> -> vector<8x1xf32>
      %c0_31 = arith.constant 0 : index
      %c0_32 = arith.constant 0 : index
      %54 = vector.load %arg6[%c0_31, %c0_32] : memref<8x256xf32, #tpu.memory_space<vmem>>, vector<8x256xf32>
      %c0_33 = arith.constant 0 : index
      %c0_34 = arith.constant 0 : index
      %55 = vector.load %arg8[%c0_33, %c0_34] : memref<8x1xf32, #tpu.memory_space<vmem>>, vector<8x1xf32>
      %56 = vector.broadcast %55 : vector<8x1xf32> to vector<8x256xf32>
      %57 = arith.subf %54, %56 : vector<8x256xf32>
      %58 = math.exp %57 : vector<8x256xf32>
      %59 = vector.broadcast %53 : vector<8x1xf32> to vector<8x256xf32>
      %60 = arith.mulf %58, %59 : vector<8x256xf32>
      %c0_35 = arith.constant 0 : index
      %c0_36 = arith.constant 0 : index
      %61 = vector.load %arg6[%c0_35, %c0_36] : memref<8x256xf32, #tpu.memory_space<vmem>>, vector<8x256xf32>
      tpu.vector_store %arg6[%c0_35, %c0_36], %60 {strides = array<i32>} : memref<8x256xf32, #tpu.memory_space<vmem>>, vector<8x256xf32>,
      %c0_37 = arith.constant 0 : index
      %c0_38 = arith.constant 0 : index
      %62 = vector.load %arg10[%c0_37, %c0_38] : memref<8x4xf32, #tpu.memory_space<vmem>>, vector<8x4xf32>
      %63 = vector.broadcast %53 : vector<8x1xf32> to vector<8x4xf32>
      %64 = arith.mulf %62, %63 : vector<8x4xf32>
      %c0_39 = arith.constant 0 : index
      %c0_40 = arith.constant 0 : index
      %65 = vector.load %arg7[%c0_39, %c0_40] : memref<8x4xf32, #tpu.memory_space<vmem>>, vector<8x4xf32>
      tpu.vector_store %arg7[%c0_39, %c0_40], %64 {strides = array<i32>} : memref<8x4xf32, #tpu.memory_space<vmem>>, vector<8x4xf32>,
    } else {
    }
    return
  }
  func.func @transform_0(%arg0: i32, %arg1: i32) -> (i32, i32) {
    %c0_i32 = arith.constant 0 : i32
    %c0_i32_0 = arith.constant 0 : i32
    return %arg0, %c0_i32 : i32, i32
  }
  func.func @transform_1(%arg0: i32, %arg1: i32) -> (i32, i32) {
    %c0_i32 = arith.constant 0 : i32
    %c0_i32_0 = arith.constant 0 : i32
    %c0_i32_1 = arith.constant 0 : i32
    return %c0_i32, %c0_i32_0 : i32, i32
  }
  func.func @transform_2(%arg0: i32, %arg1: i32) -> (i32, i32) {
    %c0_i32 = arith.constant 0 : i32
    %c0_i32_0 = arith.constant 0 : i32
    return %arg0, %c0_i32 : i32, i32
  }
  func.func @transform_3(%arg0: i32, %arg1: i32) -> (i32, i32) {
    %c0_i32 = arith.constant 0 : i32
    %c0_i32_0 = arith.constant 0 : i32
    return %c0_i32, %arg1 : i32, i32
  }
  func.func @transform_4(%arg0: i32, %arg1: i32) -> (i32, i32) {
    %c0_i32 = arith.constant 0 : i32
    %c0_i32_0 = arith.constant 0 : i32
    return %arg0, %c0_i32 : i32, i32
  }
  func.func @transform_5(%arg0: i32, %arg1: i32) -> (i32, i32) {
    %c0_i32 = arith.constant 0 : i32
    %c0_i32_0 = arith.constant 0 : i32
    return %arg0, %c0_i32 : i32, i32
  }
}

</mosaic_0001>

<llo_original>
// kernel: tpu_custom_call.1
$region0: #{tpu_custom_call.1}
  #allocation0 [shape = 'u32[]', space=smem, size = 0x4, offset = 0x4, fixed_abs, tag = 'smem constant byte address 0x4 - core index']
  #allocation1 [shape = 'u32[144,128]{1,0:T(1,128)}', space=vmem, size = 0x12000, scoped, tag = 'internal scratch']
  #allocation2 [shape = 'f32[8,1]{1,0:T(8,128)}', space=vmem, size = 0x1000, scoped, tag = 'scratch operand']
  #allocation3 [shape = 'f32[8,1]{1,0:T(8,128)}', space=vmem, size = 0x1000, scoped, tag = 'scratch operand']
  #allocation4 [shape = 'f32[8,4]{1,0:T(8,128)}', space=vmem, size = 0x1000, scoped, tag = 'scratch operand']
  %s0 = inlined_call_operand.vmem [shape: bf16[8,4], index: 0, kind: input, shape index: {}]
  %s1 = inlined_call_operand.vmem [shape: bf16[4,4], index: 1, kind: input, shape index: {}]
  %s2 = inlined_call_operand.vmem [shape: f32[8,1], index: 2, kind: input, shape index: {}]
  %s3 = inlined_call_operand.vmem [shape: bf16[4,256], index: 3, kind: input, shape index: {}]
  %s4 = inlined_call_operand.hbm [shape: f32[8,256], index: 4, kind: output, shape index: {0}]
  %s5 = inlined_call_operand.vmem [shape: f32[8,4], index: 5, kind: output, shape index: {1}]
  %6 = xla_tuple %s4, %s5
  %s7 = sld [smem:[#allocation0]]
  $region65: #{tpu_custom_call.1} parent=0
    _
  %s9 = ssub.s32 1, %s7
  %s10 = scalar_select 0, %s9, %s7
  $region1: #{tpu_custom_call.1} parent=0
    #allocation5 [shape = 'u8[8192]{0}', space=vmem, size = 0x2000, scoped, tag = 'output window, operand 0, single buffered']
    #allocation6 [shape = 's32[2]{0}', space=sflag, size = 0x8, scoped, tag = 'scoped memory for tpu_custom_call.1']
    %11 = vsyncpa [#allocation6], 0
    loop: start=0, step=1, limit=4
    $region2: #{tpu_custom_call.1} parent=1 // loop_pre_header
      _
    $region3: #{tpu_custom_call.1} parent=1 // loop_header
      %s13 = sphi 0, %s17
      %p14 = scmp.ge.s32.totalorder %s13, 4
      %s20 = sphi 0, %s32
      %s21 = sphi 0, %s28
      %s22 = sphi 0, %s20
      %s23 = sphi 0, %s21
      %s24 = sphi 0, %s22
      %s25 = sphi 0, %s23
      %s35 = sphi 0, %s37
      %s38 = sphi 0, %s35
      %s39 = sphi 0, %s38
      %s55 = sphi 0, %s39
      %s59 = sphi 0, %s59
      %s61 = sphi 0, %s59
      %s62 = sphi 0, %s61
      %s76 = sphi 0, %s62
      %s82 = sphi 0, %s84
      %s85 = sphi 0, %s82
      %s86 = sphi 0, %s85
      %s102 = sphi 0, %s86
      %s108 = sphi 0, %s110
      %s111 = sphi 0, %s108
      %s112 = sphi 0, %s111
      %s128 = sphi 0, %s112
      %s134 = sphi 0, %s136
      %s137 = sphi 0, %s134
      %s138 = sphi 0, %s137
      %s154 = sphi 0, %s138
      %s160 = sphi 0, %s162
      %s163 = sphi 0, %s160
      %s164 = sphi 0, %s163
      %s180 = sphi 0, %s164
    $region4: #{tpu_custom_call.1} parent=1 // loop_header_branch
      %16 = sbr.rel (%p14) target = $region8
    $region5: #{tpu_custom_call.1} parent=1 // loop_body
      %s18 = ssub.s32 %s13, 1
      %s19 = ssub.s32 %s13, 2
      %s26 = sadd.s32 1, %s21
      %p27 = scmp.ge.s32.totalorder %s26, 2
      %s28 = scalar_select %p27, 0, %s26
      %s29 = sadd.s32 1, %s20
      %s30 = scalar_select %p27, %s29, %s20
      %p31 = scmp.ge.s32.totalorder %s30, 1
      %s32 = scalar_select %p31, 0, %s30
      %s33 = ssub.s32 %s20, %s32
      %p34 = scmp.eq.s32.totalorder %s33, 0
      %s36 = sadd.s32 %s35, 1
      %s37 = scalar_select %p34, %s35, %s36
      %p40 = pneg %p34
      %p41 = scmp.eq.s32.totalorder %s13, 1
      %p42 = por %p40, %p41
      %p43 = scmp.ne.s32.totalorder %s35, %s38
      %p44 = scmp.eq.s32.totalorder %s13, 0
      %p45 = por %p43, %p44
      %p46 = scmp.ne.s32.totalorder %s35, %s38
      %p47 = scmp.eq.s32.totalorder %s18, 1
      %p48 = por %p46, %p47
      %p49 = scmp.ne.s32.totalorder %s38, %s39
      %p50 = scmp.eq.s32.totalorder %s18, 0
      %p51 = por %p49, %p50
      %p52 = scmp.ne.s32.totalorder %s38, %s39
      %p53 = scmp.eq.s32.totalorder %s19, 1
      %p54 = por %p52, %p53
      %p56 = scmp.ne.s32.totalorder %s39, %s55
      %p57 = scmp.eq.s32.totalorder %s19, 0
      %p58 = por %p56, %p57
      %s60 = sadd.s32 %s59, 1
      %p63 = scmp.eq.s32.totalorder %s13, 1
      %p64 = scmp.ne.s32.totalorder %s59, %s61
      %p65 = scmp.eq.s32.totalorder %s13, 0
      %p66 = por %p64, %p65
      %p67 = scmp.ne.s32.totalorder %s59, %s61
      %p68 = scmp.eq.s32.totalorder %s18, 1
      %p69 = por %p67, %p68
      %p70 = scmp.ne.s32.totalorder %s61, %s62
      %p71 = scmp.eq.s32.totalorder %s18, 0
      %p72 = por %p70, %p71
      %p73 = scmp.ne.s32.totalorder %s61, %s62
      %p74 = scmp.eq.s32.totalorder %s19, 1
      %p75 = por %p73, %p74
      %p77 = scmp.ne.s32.totalorder %s62, %s76
      %p78 = scmp.eq.s32.totalorder %s19, 0
      %p79 = por %p77, %p78
      %s80 = ssub.s32 %s20, %s32
      %p81 = scmp.eq.s32.totalorder %s80, 0
      %s83 = sadd.s32 %s82, 1
      %s84 = scalar_select %p81, %s82, %s83
      %p87 = pneg %p81
      %p88 = scmp.eq.s32.totalorder %s13, 1
      %p89 = por %p87, %p88
      %p90 = scmp.ne.s32.totalorder %s82, %s85
      %p91 = scmp.eq.s32.totalorder %s13, 0
      %p92 = por %p90, %p91
      %p93 = scmp.ne.s32.totalorder %s82, %s85
      %p94 = scmp.eq.s32.totalorder %s18, 1
      %p95 = por %p93, %p94
      %p96 = scmp.ne.s32.totalorder %s85, %s86
      %p97 = scmp.eq.s32.totalorder %s18, 0
      %p98 = por %p96, %p97
      %p99 = scmp.ne.s32.totalorder %s85, %s86
      %p100 = scmp.eq.s32.totalorder %s19, 1
      %p101 = por %p99, %p100
      %p103 = scmp.ne.s32.totalorder %s86, %s102
      %p104 = scmp.eq.s32.totalorder %s19, 0
      %p105 = por %p103, %p104
      %s106 = ssub.s32 %s21, %s28
      %p107 = scmp.eq.s32.totalorder %s106, 0
      %s109 = sadd.s32 %s108, 1
      %s110 = scalar_select %p107, %s108, %s109
      %p113 = pneg %p107
      %p114 = scmp.eq.s32.totalorder %s13, 1
      %p115 = por %p113, %p114
      %p116 = scmp.ne.s32.totalorder %s108, %s111
      %p117 = scmp.eq.s32.totalorder %s13, 0
      %p118 = por %p116, %p117
      %p119 = scmp.ne.s32.totalorder %s108, %s111
      %p120 = scmp.eq.s32.totalorder %s18, 1
      %p121 = por %p119, %p120
      %p122 = scmp.ne.s32.totalorder %s111, %s112
      %p123 = scmp.eq.s32.totalorder %s18, 0
      %p124 = por %p122, %p123
      %p125 = scmp.ne.s32.totalorder %s111, %s112
      %p126 = scmp.eq.s32.totalorder %s19, 1
      %p127 = por %p125, %p126
      %p129 = scmp.ne.s32.totalorder %s112, %s128
      %p130 = scmp.eq.s32.totalorder %s19, 0
      %p131 = por %p129, %p130
      %s132 = ssub.s32 %s20, %s32
      %p133 = scmp.eq.s32.totalorder %s132, 0
      %s135 = sadd.s32 %s134, 1
      %s136 = scalar_select %p133, %s134, %s135
      %p139 = pneg %p133
      %p140 = scmp.eq.s32.totalorder %s13, 1
      %p141 = por %p139, %p140
      %p142 = scmp.ne.s32.totalorder %s134, %s137
      %p143 = scmp.eq.s32.totalorder %s13, 0
      %p144 = por %p142, %p143
      %p145 = scmp.ne.s32.totalorder %s134, %s137
      %p146 = scmp.eq.s32.totalorder %s18, 1
      %p147 = por %p145, %p146
      %p148 = scmp.ne.s32.totalorder %s137, %s138
      %p149 = scmp.eq.s32.totalorder %s18, 0
      %p150 = por %p148, %p149
      %p151 = scmp.ne.s32.totalorder %s137, %s138
      %p152 = scmp.eq.s32.totalorder %s19, 1
      %p153 = por %p151, %p152
      %p155 = scmp.ne.s32.totalorder %s138, %s154
      %p156 = scmp.eq.s32.totalorder %s19, 0
      %p157 = por %p155, %p156
      %s158 = ssub.s32 %s20, %s32
      %p159 = scmp.eq.s32.totalorder %s158, 0
      %s161 = sadd.s32 %s160, 1
      %s162 = scalar_select %p159, %s160, %s161
      %p165 = pneg %p159
      %p166 = scmp.eq.s32.totalorder %s13, 1
      %p167 = por %p165, %p166
      %p168 = scmp.ne.s32.totalorder %s160, %s163
      %p169 = scmp.eq.s32.totalorder %s13, 0
      %p170 = por %p168, %p169
      %p171 = scmp.ne.s32.totalorder %s160, %s163
      %p172 = scmp.eq.s32.totalorder %s18, 1
      %p173 = por %p171, %p172
      %p174 = scmp.ne.s32.totalorder %s163, %s164
      %p175 = scmp.eq.s32.totalorder %s18, 0
      %p176 = por %p174, %p175
      %p177 = scmp.ne.s32.totalorder %s163, %s164
      %p178 = scmp.eq.s32.totalorder %s19, 1
      %p179 = por %p177, %p178
      %p181 = scmp.ne.s32.totalorder %s164, %s180
      %p182 = scmp.eq.s32.totalorder %s19, 0
      %p183 = por %p181, %p182
      %p184 = scmp.le.s32.totalorder 1, %s13
      %p185 = scmp.lt.s32.totalorder %s13, 3
      %p186 = pnand %p184, %p185
      %p187 = pneg %p186
      // Predicated region
      $region9: #{tpu_custom_call.1} parent=5 // pred_check
        _
      $region10: #{tpu_custom_call.1} parent=5 // pred_check_branch
        %189 = sbr.rel (%p186) target = $region12
      $region11: #{tpu_custom_call.1} parent=5 // pred_region
        %s190 = ssub.s32 %s13, 1
        // Predicated region
        $region13: #{tpu_custom_call.1} parent=11 // pred_check
          %p191 = pneg %p51
        $region14: #{tpu_custom_call.1} parent=11 // pred_check_branch
          %193 = sbr.rel (%p191) target = $region16
        $region15: #{tpu_custom_call.1} parent=11 // pred_region
          %p194 = scmp.lt.s32.totalorder %s22, 0
          %s195 = scalar_select %p194, %s22, 0
          %s196 = smul.addr %s195, 4
          %s197 = scalar_lea.vmem %s0, %s196
        $region16: #{tpu_custom_call.1} parent=11 // pred_fallthru
          _
        // Predicated region
        $region17: #{tpu_custom_call.1} parent=11 // pred_check
          %p198 = pneg %p72
        $region18: #{tpu_custom_call.1} parent=11 // pred_check_branch
          %200 = sbr.rel (%p198) target = $region20
        $region19: #{tpu_custom_call.1} parent=11 // pred_region
          _
        $region20: #{tpu_custom_call.1} parent=11 // pred_fallthru
          _
        // Predicated region
        $region21: #{tpu_custom_call.1} parent=11 // pred_check
          %p201 = pneg %p98
        $region22: #{tpu_custom_call.1} parent=11 // pred_check_branch
          %203 = sbr.rel (%p201) target = $region24
        $region23: #{tpu_custom_call.1} parent=11 // pred_region
          %p204 = scmp.lt.s32.totalorder %s22, 0
          %s205 = scalar_select %p204, %s22, 0
          %s206 = smul.addr %s205, 8
          %s207 = scalar_lea.vmem %s2, %s206
        $region24: #{tpu_custom_call.1} parent=11 // pred_fallthru
          _
      $region12: #{tpu_custom_call.1} parent=5 // pred_fallthru
        _
      %p208 = scmp.lt.s32.totalorder %s13, 2
      // Predicated region
      $region25: #{tpu_custom_call.1} parent=5 // pred_check
        %p209 = pneg %p208
      $region26: #{tpu_custom_call.1} parent=5 // pred_check_branch
        %211 = sbr.rel (%p209) target = $region28
      $region27: #{tpu_custom_call.1} parent=5 // pred_region
        // Predicated region
        $region29: #{tpu_custom_call.1} parent=27 // pred_check
          %p212 = pneg %p118
        $region30: #{tpu_custom_call.1} parent=27 // pred_check_branch
          %214 = sbr.rel (%p212) target = $region32
        $region31: #{tpu_custom_call.1} parent=27 // pred_region
          %p215 = scmp.lt.s32.totalorder %s21, 1
          %s216 = scalar_select %p215, %s21, 1
          %s217 = smul.addr %s216, 2
          %s218 = scalar_lea.vmem %s3, %s217
        $region32: #{tpu_custom_call.1} parent=27 // pred_fallthru
          _
      $region28: #{tpu_custom_call.1} parent=5 // pred_fallthru
        _
      %p219 = scmp.le.s32.totalorder 1, %s13
      %p220 = scmp.lt.s32.totalorder %s13, 3
      %p221 = pnand %p219, %p220
      %p222 = pneg %p221
      // Predicated region
      $region33: #{tpu_custom_call.1} parent=5 // pred_check
        _
      $region34: #{tpu_custom_call.1} parent=5 // pred_check_branch
        %224 = sbr.rel (%p221) target = $region36
      $region35: #{tpu_custom_call.1} parent=5 // pred_region
        %s225 = ssub.s32 %s13, 1
        %p226 = scmp.lt.s32.totalorder %s22, 0
        %s227 = scalar_select %p226, %s22, 0
        %s228 = smul.addr %s227, 4
        %s229 = scalar_lea.vmem %s0, %s228
        %p230 = pneg %p51
        %p231 = pneg %p48
        %p232 = pneg %p72
        %p233 = pneg %p69
        %p234 = scmp.lt.s32.totalorder %s22, 0
        %s235 = scalar_select %p234, %s22, 0
        %s236 = smul.addr %s235, 8
        %s237 = scalar_lea.vmem %s2, %s236
        %p238 = pneg %p98
        %p239 = pneg %p95
        %p240 = scmp.lt.s32.totalorder %s23, 1
        %s241 = scalar_select %p240, %s23, 1
        %s242 = smul.addr %s241, 2
        %s243 = scalar_lea.vmem %s3, %s242
        %p244 = pneg %p124
        %p245 = pneg %p121
        %p246 = pneg %p150
        %p247 = pneg %p147
        %p248 = pneg %p176
        %p249 = pneg %p173
        %p250 = scmp.lt.s32.totalorder %s22, 0
        %s251 = scalar_select %p250, %s22, 0
        %s252 = smul.addr %s251, 8
        %s253 = scalar_lea.vmem %s5, %s252
        %p254 = scmp.lt.s32.totalorder %s22, 0
        %s255 = scalar_select %p254, %s22, 0
        %s256 = smul.addr %s255, 4
        %s257 = scalar_lea.vmem %s0, %s256
        %p258 = scmp.lt.s32.totalorder %s22, 0
        %s259 = scalar_select %p258, %s22, 0
        %s260 = smul.addr %s259, 8
        %s261 = scalar_lea.vmem %s2, %s260
        %p262 = scmp.lt.s32.totalorder %s23, 1
        %s263 = scalar_select %p262, %s23, 1
        %s264 = smul.addr %s263, 2
        %s265 = scalar_lea.vmem %s3, %s264
        %p266 = scmp.lt.s32.totalorder %s22, 0
        %s267 = scalar_select %p266, %s22, 0
        %s268 = smul.addr %s267, 8
        %s269 = scalar_lea.vmem %s5, %s268
        %p271 = scmp.eq.s32.totalorder %s23, 0
        // Predicated region
        $region37: #{tpu_custom_call.1} parent=35 // pred_check
          %p272 = pneg %p271
        $region38: #{tpu_custom_call.1} parent=35 // pred_check_branch
          %274 = sbr.rel (%p272) target = $region40
        $region39: #{tpu_custom_call.1} parent=35 // pred_region
          %vm275 = vcmask 7168
          %276 = vst.msk [vmem:[#allocation2] sm:$0xff] %vm275, -inf
          %277 = vst.msk [vmem:[#allocation3] sm:$0xff] %vm275, 0.0
          %vm278 = vcmask 31744
          %279 = vst.msk [vmem:[#allocation4] sm:$0xff] %vm278, 0.0
        $region40: #{tpu_custom_call.1} parent=35 // pred_fallthru
          _
        %v280 = vld [vmem:[%s265] sm:$0x3]
        %v281 = vld [vmem:[%s257] sm:$0xf]
        %vm282 = vcmask 31744
        %v284 = vsel %vm282, %v281, 0
        %vm286 = vcmask 1041408
        %v288 = vsel %vm286, %v280, 0
        %290 = vmatprep.subr.bf16.mxu0 0
        %291 = vmatpush1.bf16.msra.mxu0 %v288
        %292 = vmatprep.subr.bf16.mxu0 0
        %293 = vmatpush1.bf16.msra.mxu0 0
        %294 = vmatprep.subr.bf16.mxu0 0
        %295 = vmatpush1.bf16.msra.mxu0 0
        %296 = vmatprep.subr.bf16.mxu0 0
        %297 = vmatpush1.bf16.msra.mxu0 0
        %298 = vmatprep.subr.bf16.mxu0 0
        %299 = vmatpush1.bf16.msra.mxu0 0
        %300 = vmatprep.subr.bf16.mxu0 0
        %301 = vmatpush1.bf16.msra.mxu0 0
        %302 = vmatprep.subr.bf16.mxu0 0
        %303 = vmatpush1.bf16.msra.mxu0 0
        %304 = vmatprep.subr.bf16.mxu0 0
        %305 = vmatpush1.bf16.msra.mxu0 0
        %306 = vmatprep.subr.bf16.mxu0 0
        %307 = vmatpush1.bf16.msra.mxu0 0
        %308 = vmatprep.subr.bf16.mxu0 0
        %309 = vmatpush1.bf16.msra.mxu0 0
        %310 = vmatprep.subr.bf16.mxu0 0
        %311 = vmatpush1.bf16.msra.mxu0 0
        %312 = vmatprep.subr.bf16.mxu0 0
        %313 = vmatpush1.bf16.msra.mxu0 0
        %314 = vmatprep.subr.bf16.mxu0 0
        %315 = vmatpush1.bf16.msra.mxu0 0
        %316 = vmatprep.subr.bf16.mxu0 0
        %317 = vmatpush1.bf16.msra.mxu0 0
        %318 = vmatprep.subr.bf16.mxu0 0
        %319 = vmatpush1.bf16.msra.mxu0 0
        %320 = vmatprep.subr.bf16.mxu0 0
        %321 = vmatpush1.bf16.msra.mxu0 0
        %322 = vmatprep.mubr.bf16.mxu0 0
        %323 = vmatmul.mubr.bf16.gmra.mrb[0].mxu0 %v284
        %v324 = vpop.f32.mrb[0].mxu0
        %v325 = vadd.f32 0.0, %v324
        %v326 = vpop.f32.mrb[0].mxu0
        %v327 = vpop.f32.mrb[0].mxu0
        %v328 = vpop.f32.mrb[0].mxu0
        %329 = vdwg.mxu0
        %v330 = vld [vmem:[%s1] sm:$0x3]
        %v332 = vsel %vm282, %v330, 0
        %334 = vmatprep.subr.bf16.mxu0 0
        %335 = vmatpush1.bf16.msra.mxu0 %v288
        %336 = vmatprep.subr.bf16.mxu0 0
        %337 = vmatpush1.bf16.msra.mxu0 0
        %338 = vmatprep.subr.bf16.mxu0 0
        %339 = vmatpush1.bf16.msra.mxu0 0
        %340 = vmatprep.subr.bf16.mxu0 0
        %341 = vmatpush1.bf16.msra.mxu0 0
        %342 = vmatprep.subr.bf16.mxu0 0
        %343 = vmatpush1.bf16.msra.mxu0 0
        %344 = vmatprep.subr.bf16.mxu0 0
        %345 = vmatpush1.bf16.msra.mxu0 0
        %346 = vmatprep.subr.bf16.mxu0 0
        %347 = vmatpush1.bf16.msra.mxu0 0
        %348 = vmatprep.subr.bf16.mxu0 0
        %349 = vmatpush1.bf16.msra.mxu0 0
        %350 = vmatprep.subr.bf16.mxu0 0
        %351 = vmatpush1.bf16.msra.mxu0 0
        %352 = vmatprep.subr.bf16.mxu0 0
        %353 = vmatpush1.bf16.msra.mxu0 0
        %354 = vmatprep.subr.bf16.mxu0 0
        %355 = vmatpush1.bf16.msra.mxu0 0
        %356 = vmatprep.subr.bf16.mxu0 0
        %357 = vmatpush1.bf16.msra.mxu0 0
        %358 = vmatprep.subr.bf16.mxu0 0
        %359 = vmatpush1.bf16.msra.mxu0 0
        %360 = vmatprep.subr.bf16.mxu0 0
        %361 = vmatpush1.bf16.msra.mxu0 0
        %362 = vmatprep.subr.bf16.mxu0 0
        %363 = vmatpush1.bf16.msra.mxu0 0
        %364 = vmatprep.subr.bf16.mxu0 0
        %365 = vmatpush1.bf16.msra.mxu0 0
        %366 = vmatprep.mubr.bf16.mxu0 0
        %367 = vmatmul.mubr.bf16.gmra.mrb[0].mxu0 %v332
        %v368 = vpop.f32.mrb[0].mxu0
        %v369 = vadd.f32 0.0, %v368
        %v370 = vpop.f32.mrb[0].mxu0
        %v371 = vpop.f32.mrb[0].mxu0
        %v372 = vpop.f32.mrb[0].mxu0
        %373 = vdwg.mxu0
        %v374 = vunpack.c.l.bf16 %v280
        %v375 = vmul.f32 %v374, %v369
        %vm376 = vcmask 1043456
        %v377 = vsel %vm376, %v375, 0.0
        %v378 = vrot.slane %v377, 4
        %v379 = vadd.f32 %v377, %v378
        %v380 = vrot.slane %v379, 2
        %v381 = vadd.f32 %v379, %v380
        %v382 = vrot.slane %v381, 1
        %v383 = vadd.f32 %v381, %v382
        %v384 = vmax.f32 %v383, 0.0
        %v385 = vrsqrt.pop %v384
        %v386 = vmul.f32 %v384, %v385
        %vm387 = vcmp.eq.f32.partialorder %v384, inf
        %v388 = vsel %vm387, %v384, %v386
        %vm389 = vcmp.eq.f32.partialorder %v384, 0.0
        %v390 = vand.u32 %v384, 2147483648
        %v391 = vsel %vm389, %v390, %v388
        %v392 = vld [vmem:[%s261] sm:$0xff]
        %394 = vset.pattern.permute.xlu0 0
        %395 = vperm.xlu0 %394, %v392
        %v396 = vpop.permute.xlu0 %395
        %v398 = vmul.f32 %v396, %v391
        %v399 = vmax.f32 %v398, 0.0001
        %v400 = vrcp.pop %v399
        %v401 = vmul.f32 %v325, %v400
        %s402 = smul.u32 %s23, 128
        %s403 = sshra.s32 %s402, 7
        %s404 = sand.u32 %s402, 127
        %s405 = smul.addr %s403, 8
        %s406 = scalar_lea.vmem [#allocation5], %s405
        %407 = vst [vmem:[%s406] sm:$0xff] %v401
        %v408 = vld [vmem:[#allocation2] sm:$0xff]
        %409 = vmax.xlane.f32.xlu0 %v401
        %v410 = vpop.xlane.xlu0 %409
        %v411 = vmax.f32 %v408, %v410
        %v412 = vsub.f32 %v408, %v411
        %v413 = vmul.f32 %v412, 1.442695
        %v414 = vpow.pop %v413
        %416 = vset.pattern.permute.xlu0 0
        %417 = vperm.xlu0 %416, %v411
        %v418 = vpop.permute.xlu0 %417
        %v420 = vsub.f32 %v401, %v418
        %v421 = vmul.f32 %v420, 1.442695
        %v422 = vpow.pop %v421
        %v423 = vld [vmem:[#allocation3] sm:$0xff]
        %v424 = vmul.f32 %v414, %v423
        %425 = vadd.xlane.f32.xlu0 %v422
        %v426 = vpop.xlane.xlu0 %425
        %v427 = vadd.f32 %v424, %v426
        %vm428 = vcmask 7168
        %429 = vst.msk [vmem:[#allocation3] sm:$0xff] %vm428, %v427
        %v430 = vld [vmem:[#allocation4] sm:$0xff]
        %432 = vset.pattern.permute.xlu0 0
        %433 = vperm.xlu0 %432, %v414
        %v434 = vpop.permute.xlu0 %433
        %v436 = vmul.f32 %v434, %v430
        %v437 = vpack.c.bf16 %v422, %v422
        %438 = vmatprep.subr.bf16.mxu0 0
        %439 = vmatpush1.bf16.xpose.msra.mxu0 %v280
        %440 = vmatprep.subr.bf16.mxu0 0
        %441 = vmatpush1.bf16.xpose.msra.mxu0 0
        %442 = vmatprep.subr.bf16.mxu0 0
        %443 = vmatpush1.bf16.xpose.msra.mxu0 0
        %444 = vmatprep.subr.bf16.mxu0 0
        %445 = vmatpush1.bf16.xpose.msra.mxu0 0
        %446 = vmatprep.subr.bf16.mxu0 0
        %447 = vmatpush1.bf16.xpose.msra.mxu0 0
        %448 = vmatprep.subr.bf16.mxu0 0
        %449 = vmatpush1.bf16.xpose.msra.mxu0 0
        %450 = vmatprep.subr.bf16.mxu0 0
        %451 = vmatpush1.bf16.xpose.msra.mxu0 0
        %452 = vmatprep.subr.bf16.mxu0 0
        %453 = vmatpush1.bf16.xpose.msra.mxu0 0
        %454 = vmatprep.subr.bf16.mxu0 0
        %455 = vmatpush1.bf16.xpose.msra.mxu0 0
        %456 = vmatprep.subr.bf16.mxu0 0
        %457 = vmatpush1.bf16.xpose.msra.mxu0 0
        %458 = vmatprep.subr.bf16.mxu0 0
        %459 = vmatpush1.bf16.xpose.msra.mxu0 0
        %460 = vmatprep.subr.bf16.mxu0 0
        %461 = vmatpush1.bf16.xpose.msra.mxu0 0
        %462 = vmatprep.subr.bf16.mxu0 0
        %463 = vmatpush1.bf16.xpose.msra.mxu0 0
        %464 = vmatprep.subr.bf16.mxu0 0
        %465 = vmatpush1.bf16.xpose.msra.mxu0 0
        %466 = vmatprep.subr.bf16.mxu0 0
        %467 = vmatpush1.bf16.xpose.msra.mxu0 0
        %468 = vmatprep.subr.bf16.mxu0 0
        %469 = vmatpush1.bf16.xpose.msra.mxu0 0
        %470 = vmatprep.mubr.bf16.mxu0 0
        %471 = vmatmul.mubr.bf16.gmra.mrb[0].mxu0 %v437
        %v472 = vpop.f32.mrb[0].mxu0
        %v473 = vadd.f32 0.0, %v472
        %v474 = vpop.f32.mrb[0].mxu0
        %v475 = vpop.f32.mrb[0].mxu0
        %v476 = vpop.f32.mrb[0].mxu0
        %477 = vdwg.mxu0
        %v478 = vadd.f32 %v436, %v473
        %479 = vst.msk [vmem:[#allocation4] sm:$0xff] %vm282, %v478
        %480 = vst.msk [vmem:[#allocation2] sm:$0xff] %vm428, %v411
        %p481 = scmp.eq.s32.totalorder %s23, 1
        // Predicated region
        $region41: #{tpu_custom_call.1} parent=35 // pred_check
          %p482 = pneg %p481
        $region42: #{tpu_custom_call.1} parent=35 // pred_check_branch
          %484 = sbr.rel (%p482) target = $region44
        $region43: #{tpu_custom_call.1} parent=35 // pred_region
          %v485 = vld [vmem:[#allocation3] sm:$0xff]
          %v486 = vrcp.pop %v485
          %v487 = vld [vmem:[#allocation5] sm:$0xff]
          %v488 = vld [vmem:[#allocation5 + $0x8] sm:$0xff]
          %v489 = vld [vmem:[#allocation2] sm:$0xff]
          %491 = vset.pattern.permute.xlu0 0
          %492 = vperm.xlu0 %491, %v489
          %v493 = vpop.permute.xlu0 %492
          %v495 = vsub.f32 %v487, %v493
          %v496 = vsub.f32 %v488, %v493
          %v497 = vmul.f32 %v495, 1.442695
          %v498 = vpow.pop %v497
          %v499 = vmul.f32 %v496, 1.442695
          %v500 = vpow.pop %v499
          %502 = vset.pattern.permute.xlu0 0
          %503 = vperm.xlu0 %502, %v486
          %v504 = vpop.permute.xlu0 %503
          %v506 = vmul.f32 %v498, %v504
          %v507 = vmul.f32 %v500, %v504
          %508 = vst [vmem:[#allocation5] sm:$0xff] %v506
          %509 = vst [vmem:[#allocation5 + $0x8] sm:$0xff] %v507
          %v510 = vld [vmem:[#allocation4] sm:$0xff]
          %v511 = vmul.f32 %v510, %v504
          %512 = vst.msk [vmem:[%s269] sm:$0xff] %vm282, %v511
        $region44: #{tpu_custom_call.1} parent=35 // pred_fallthru
          _
        %p513 = scmp.lt.s32.totalorder %s22, 0
        %s514 = scalar_select %p513, %s22, 0
        %s515 = smul.addr %s514, 8
        %s516 = scalar_lea.vmem %s5, %s515
        // Predicated region
        $region45: #{tpu_custom_call.1} parent=35 // pred_check
          %p517 = pneg %p147
        $region46: #{tpu_custom_call.1} parent=35 // pred_check_branch
          %519 = sbr.rel (%p517) target = $region48
        $region47: #{tpu_custom_call.1} parent=35 // pred_region
          %s521 = ssub.s32 256, 256
          %522 = vsyncadd [#allocation6], %s521
          %s523 = smul.addr %s22, 2
          %s524 = smul.addr %s523, 128
          %s525 = scalar_lea.hbm %s4, %s524
          %s527 = sshll.u32 [#allocation5], 4
          %s528 = int_to_ptr.vmem [resolvable:$true] %s527
          %530 = dma.vmem_to_hbm [thread:$0]  %s528, 256, %s525, [#allocation6]
        $region48: #{tpu_custom_call.1} parent=35 // pred_fallthru
          _
        // Predicated region
        $region49: #{tpu_custom_call.1} parent=35 // pred_check
          %p531 = pneg %p173
        $region50: #{tpu_custom_call.1} parent=35 // pred_check_branch
          %533 = sbr.rel (%p531) target = $region52
        $region51: #{tpu_custom_call.1} parent=35 // pred_region
          _
        $region52: #{tpu_custom_call.1} parent=35 // pred_fallthru
          _
        // Predicated region
        $region53: #{tpu_custom_call.1} parent=35 // pred_check
          %p534 = pneg %p147
        $region54: #{tpu_custom_call.1} parent=35 // pred_check_branch
          %536 = sbr.rel (%p534) target = $region56
        $region55: #{tpu_custom_call.1} parent=35 // pred_region
          %537 = dma.done [#allocation6], 256
        $region56: #{tpu_custom_call.1} parent=35 // pred_fallthru
          _
        // Predicated region
        $region57: #{tpu_custom_call.1} parent=35 // pred_check
          %p538 = pneg %p173
        $region58: #{tpu_custom_call.1} parent=35 // pred_check_branch
          %540 = sbr.rel (%p538) target = $region60
        $region59: #{tpu_custom_call.1} parent=35 // pred_region
          %p541 = scmp.lt.s32.totalorder %s22, 0
          %s542 = scalar_select %p541, %s22, 0
          %s543 = smul.addr %s542, 8
          %s544 = scalar_lea.vmem %s5, %s543
        $region60: #{tpu_custom_call.1} parent=35 // pred_fallthru
          _
      $region36: #{tpu_custom_call.1} parent=5 // pred_fallthru
        _
      %p545 = scmp.le.s32.totalorder 2, %s13
      // Predicated region
      $region61: #{tpu_custom_call.1} parent=5 // pred_check
        %p546 = pneg %p545
      $region62: #{tpu_custom_call.1} parent=5 // pred_check_branch
        %548 = sbr.rel (%p546) target = $region64
      $region63: #{tpu_custom_call.1} parent=5 // pred_region
        %s549 = ssub.s32 %s13, 2
      $region64: #{tpu_custom_call.1} parent=5 // pred_fallthru
        _
    $region6: #{tpu_custom_call.1} parent=1 // loop_footer
      %s17 = sadd.s32 1, %s13
    $region7: #{tpu_custom_call.1} parent=1 // loop_footer_branch
      %12 = sbr.rel target = $region3
    $region8: #{tpu_custom_call.1} parent=1 // loop_exit
      _
    %550 = vsyncpa [#allocation6], 1
    %s551 = scalar_lea.sflag [#allocation6], 1
    %552 = vsyncpa %s551, 1

</llo_original>
